<compile_context>
chip_gen: v7x
topology: tpu7x:2x2x1
jax: 0.10.0
libtpu: 0.0.40
codegen_flags: <defaults>
</compile_context>

<pallas_src>
import functools

import jax
import jax.numpy as jnp
from jax.experimental import pallas as pl
from jax.experimental.pallas import tpu as pltpu


def _round_up(n, m):
    return ((n + m - 1) // m) * m


# ------------------------------ Pallas kernel ------------------------------

def _fused_sage_kernel(layer_dims, *refs):
    """Fused multi-layer GraphSAGE forward (all layers in one kernel).

    refs = [x_ref,
            (src_row_ref, tgt_row_ref, w_top_ref, w_bot_ref, b_ref) per layer,
            o_ref]
    """
    num_layers = len(layer_dims)
    x_ref = refs[0]
    o_ref = refs[-1]

    h = x_ref[...]                                            # [n_src0, Dp] f32
    for i in range(num_layers):
        s_ref, t_ref, wt_ref, wb_ref, b_ref = refs[1 + 5 * i: 1 + 5 * (i + 1)]
        n_src, n_tgt = layer_dims[i]

        src_row = s_ref[...]                                  # [1, Ep] int32 (-1 pad)
        tgt_row = t_ref[...]                                  # [1, Ep] int32 (-1 pad)
        ep = src_row.shape[1]

        # One-hot edge matrices, both in identical [n, Ep] row layout
        # (padded edges carry -1 and never match the iota -> contribute 0).
        onehot_src = (jax.lax.broadcasted_iota(jnp.int32, (n_src, ep), 0)
                      == src_row).astype(jnp.float32)         # [n_src, Ep]
        onehot_tgt = (jax.lax.broadcasted_iota(jnp.int32, (n_tgt, ep), 0)
                      == tgt_row).astype(jnp.float32)         # [n_tgt, Ep]

        # Small aggregation matrix A[t, s] = #edges(s -> t); contract over the
        # edge axis (K = Ep, MXU-aligned) with a transposed-RHS dot_general.
        a = jax.lax.dot_general(
            onehot_tgt, onehot_src,
            dimension_numbers=(((1,), (1,)), ((), ())),
            preferred_element_type=jnp.float32)               # [n_tgt, n_src]

        # Fold the mean into A: scale rows by 1/max(deg,1) (EUP reciprocal on a
        # tiny [n_tgt, 1] operand) before the wide matmul.
        deg = jnp.sum(a, axis=1, keepdims=True)               # [n_tgt, 1]
        inv_deg = pl.reciprocal(jnp.maximum(deg, 1.0), approx=False)
        a = a * inv_deg

        # scatter_mean(x[src], tgt) == A_norm @ h  (one MXU matmul).
        aggr = jnp.dot(a, h, preferred_element_type=jnp.float32)   # [n_tgt, Dp]

        # Linear(2D -> D) on cat([target_x, aggr]) without the concat:
        # two accumulated K=Dp matmuls + bias.
        target_x = h[:n_tgt]
        h = (jnp.dot(target_x, wt_ref[...], preferred_element_type=jnp.float32)
             + jnp.dot(aggr, wb_ref[...], preferred_element_type=jnp.float32)
             + b_ref[...])
        if i != num_layers - 1:
            h = jnp.maximum(h, 0.0)

    o_ref[...] = h.astype(o_ref.dtype)


# ------------------------------ Parameter prep (one-time) -------------------

def prepare_params(params, latent_dim):
    """Hoisted one-time padding/splitting of the per-layer Linear params.

    params: list of (w [D, 2D] torch-layout weight, b [D])
    Returns list of (w_top [Dp, Dp], w_bot [Dp, Dp], b_pad [1, Dp]) such that
      cat([xt_pad, aggr_pad]) @ w.T + b ==
      xt_pad @ w_top + aggr_pad @ w_bot + b_pad   (on the first D lanes).
    """
    D = latent_dim
    Dp = _round_up(D, 128)
    prepped = []
    for w, b in params:
        wt = jnp.asarray(w, jnp.float32).T                    # [2D, D]
        w_top = jnp.zeros((Dp, Dp), jnp.float32).at[:D, :D].set(wt[:D])
        w_bot = jnp.zeros((Dp, Dp), jnp.float32).at[:D, :D].set(wt[D:])
        b_pad = jnp.zeros((1, Dp), jnp.float32).at[0, :D].set(
            jnp.asarray(b, jnp.float32))
        prepped.append((w_top, w_bot, b_pad))
    return prepped


# ------------------------------ JAX glue ------------------------------

def text_sage_forward(x, adjs, prepped_params, latent_dim):
    """Replicates TextSAGE.forward(x, adjs) in inference mode.

    x:              [N0, D] float32 node embeddings (output of get_initial_emb)
    adjs:           list of (edge_index [2, E] int32, e_id (unused),
                             size (n_src, n_tgt))
    prepped_params: output of prepare_params (padded/split weights, cached)
    """
    # TODO(synk): nn.Dropout(0.2) on source_x is train-mode only; inference
    # (identity) is implemented here.
    # TODO(synk): if multiple sampled subgraphs are processed per step, add a
    # leading "parallel" grid axis so v7x's second TensorCore is used.
    num_layers = len(adjs)
    D = latent_dim
    Dp = _round_up(D, 128)

    assert x.shape[0] == int(adjs[0][2][0])
    x_pad = jnp.pad(x.astype(jnp.float32), ((0, 0), (0, Dp - D)))

    args = [x_pad]
    layer_dims = []
    for i, (edge_index, _, size) in enumerate(adjs):
        n_src, n_tgt = int(size[0]), int(size[1])
        if i > 0:
            assert n_src == layer_dims[i - 1][1]
        src = jnp.asarray(edge_index[0], jnp.int32)
        tgt = jnp.asarray(edge_index[1], jnp.int32)
        E = src.shape[0]
        Ep = _round_up(E, 128)
        # Dense [1, Ep] row layout for both index vectors (-1 = pad).
        src_row = jnp.pad(src, (0, Ep - E), constant_values=-1).reshape(1, Ep)
        tgt_row = jnp.pad(tgt, (0, Ep - E), constant_values=-1).reshape(1, Ep)

        w_top, w_bot, b_pad = prepped_params[i]
        args += [src_row, tgt_row, w_top, w_bot, b_pad]
        layer_dims.append((n_src, n_tgt))

    n_out = layer_dims[-1][1]
    kernel = functools.partial(_fused_sage_kernel, tuple(layer_dims))
    vmem = pl.BlockSpec(memory_space=pltpu.MemorySpace.VMEM)
    out = pl.pallas_call(
        kernel,
        in_specs=[vmem] * len(args),
        out_specs=vmem,
        out_shape=jax.ShapeDtypeStruct((n_out, Dp), jnp.float32),
    )(*args)
    return out[:, :D]


def init_params(key, latent_dim, num_layers):
    """Deterministic init matching TextSAGE.init_parameters for w_linears."""
    params = []
    for i in range(num_layers):
        key, wk = jax.random.split(key)
        gain = 1.0 if i == num_layers - 1 else 0.1
        fan_in, fan_out = 2 * latent_dim, latent_dim
        bound = gain * (6.0 / (fan_in + fan_out)) ** 0.5
        # torch Linear weight layout [out, in] = [D, 2D]
        w = jax.random.uniform(wk, (latent_dim, 2 * latent_dim),
                               jnp.float32, -bound, bound)
        b = jnp.zeros((latent_dim,), jnp.float32)
        params.append((w, b))
    return params


# ------------------------------ Pure-JAX reference ------------------------------

def forward_ref(x, adjs, params):
    num_layers = len(adjs)
    for i, (edge_index, _, size) in enumerate(adjs):
        src, tgt = edge_index[0], edge_index[1]
        n_tgt = int(size[1])
        source_x = x[src]
        sums = jnp.zeros((n_tgt, x.shape[1]), jnp.float32).at[tgt].add(source_x)
        cnts = jnp.zeros((n_tgt, 1), jnp.float32).at[tgt].add(1.0)
        aggr = sums / jnp.maximum(cnts, 1.0)
        w, b = params[i]
        x = jnp.concatenate([x[:n_tgt], aggr], axis=1) @ w.T + b
        if i != num_layers - 1:
            x = jnp.maximum(x, 0.0)
    return x


# ------------------------------ Main ------------------------------

if __name__ == "__main__":
    key = jax.random.PRNGKey(0)
    latent_dim = 32          # config['recdim']
    num_layers = 2           # config['layer']

    # Neighbor-sampled subgraph sizes (NeighborSampler semantics):
    #   layer 0: 40 source nodes -> 24 target nodes
    #   layer 1: 24 source nodes ->  8 target nodes
    n0, n1, n2 = 40, 24, 8
    e0, e1 = 96, 48

    key, kx, ke0s, ke0t, ke1s, ke1t, kp = jax.random.split(key, 7)
    x = jax.random.normal(kx, (n0, latent_dim), jnp.float32)

    ei0 = jnp.stack([
        jax.random.randint(ke0s, (e0,), 0, n0, jnp.int32),
        jax.random.randint(ke0t, (e0,), 0, n1, jnp.int32),
    ], axis=0)
    ei1 = jnp.stack([
        jax.random.randint(ke1s, (e1,), 0, n1, jnp.int32),
        jax.random.randint(ke1t, (e1,), 0, n2, jnp.int32),
    ], axis=0)

    adjs = [
        (ei0, None, (n0, n1)),
        (ei1, None, (n1, n2)),
    ]

    params = init_params(kp, latent_dim, num_layers)
    # One-time parameter padding/splitting (hoisted out of the per-call path).
    prepped = prepare_params(params, latent_dim)
    prepped = jax.tree_util.tree_map(jax.block_until_ready, prepped)

    out = text_sage_forward(x, adjs, prepped, latent_dim)
    out = jax.block_until_ready(out)

    ref = forward_ref(x, adjs, params)
    assert out.shape == (n2, latent_dim)
    assert jnp.allclose(out, ref, atol=1e-4, rtol=1e-4), "mismatch vs reference"

    print("KERNEL_OK")
</pallas_src>

<mosaic_0001>
module attributes {stable_mosaic.version = 11 : i64} {
  func.func @_fused_sage_kernel(%arg0: memref<40x128xf32, #tpu.memory_space<vmem>>, %arg1: memref<1x128xi32, #tpu.memory_space<vmem>>, %arg2: memref<1x128xi32, #tpu.memory_space<vmem>>, %arg3: memref<128x128xf32, #tpu.memory_space<vmem>>, %arg4: memref<128x128xf32, #tpu.memory_space<vmem>>, %arg5: memref<1x128xf32, #tpu.memory_space<vmem>>, %arg6: memref<1x128xi32, #tpu.memory_space<vmem>>, %arg7: memref<1x128xi32, #tpu.memory_space<vmem>>, %arg8: memref<128x128xf32, #tpu.memory_space<vmem>>, %arg9: memref<128x128xf32, #tpu.memory_space<vmem>>, %arg10: memref<1x128xf32, #tpu.memory_space<vmem>>, %arg11: memref<8x128xf32, #tpu.memory_space<vmem>>) attributes {dimension_semantics = [], scalar_prefetch = 0 : i64, scratch_operands = 0 : i64, tpu.core_type = #tpu.core_type<tc>} {
    %c0 = arith.constant 0 : index
    %c0_0 = arith.constant 0 : index
    %0 = vector.load %arg0[%c0, %c0_0] : memref<40x128xf32, #tpu.memory_space<vmem>>, vector<40x128xf32>
    %c0_1 = arith.constant 0 : index
    %c0_2 = arith.constant 0 : index
    %1 = vector.load %arg1[%c0_1, %c0_2] : memref<1x128xi32, #tpu.memory_space<vmem>>, vector<1x128xi32>
    %c0_3 = arith.constant 0 : index
    %c0_4 = arith.constant 0 : index
    %2 = vector.load %arg2[%c0_3, %c0_4] : memref<1x128xi32, #tpu.memory_space<vmem>>, vector<1x128xi32>
    %3 = tpu.iota {dimensions = array<i32: 0>} : vector<40x128xi32>
    %4 = vector.broadcast %1 : vector<1x128xi32> to vector<40x128xi32>
    %5 = arith.cmpi eq, %3, %4 : vector<40x128xi32>
    %6 = arith.extui %5 : vector<40x128xi1> to vector<40x128xi32>
    %7 = arith.sitofp %6 : vector<40x128xi32> to vector<40x128xf32>
    %8 = tpu.iota {dimensions = array<i32: 0>} : vector<24x128xi32>
    %9 = vector.broadcast %2 : vector<1x128xi32> to vector<24x128xi32>
    %10 = arith.cmpi eq, %8, %9 : vector<24x128xi32>
    %11 = arith.extui %10 : vector<24x128xi1> to vector<24x128xi32>
    %12 = arith.sitofp %11 : vector<24x128xi32> to vector<24x128xf32>
    %cst = arith.constant dense<0.000000e+00> : vector<24x40xf32>
    %13 = tpu.matmul %12, %7, %cst {dimension_numbers = #tpu.dot_dimension_numbers<[1], [1], [0], [0], [0, 0, 1, 0], [], []>} : vector<24x128xf32>, vector<40x128xf32>, vector<24x40xf32> -> vector<24x40xf32>
    %cst_5 = arith.constant dense<0.000000e+00> : vector<24xf32>
    %14 = vector.multi_reduction <add>, %13, %cst_5 [1] : vector<24x40xf32> to vector<24xf32>
    %15 = vector.shape_cast %14 : vector<24xf32> to vector<24x1xf32>
    %cst_6 = arith.constant 1.000000e+00 : f32
    %16 = vector.broadcast %cst_6 : f32 to vector<24x1xf32>
    %17 = arith.maximumf %15, %16 : vector<24x1xf32>
    %18 = tpu.reciprocal %17 : vector<24x1xf32> -> vector<24x1xf32>
    %19 = vector.broadcast %18 : vector<24x1xf32> to vector<24x40xf32>
    %20 = arith.mulf %13, %19 : vector<24x40xf32>
    %cst_7 = arith.constant dense<0.000000e+00> : vector<24x128xf32>
    %21 = tpu.matmul %20, %0, %cst_7 {dimension_numbers = #tpu.dot_dimension_numbers<[1], [0], [0], [1], [0, 0, 1, 1], [], []>} : vector<24x40xf32>, vector<40x128xf32>, vector<24x128xf32> -> vector<24x128xf32>
    %22 = vector.extract_strided_slice %0 {offsets = [0, 0], sizes = [24, 128], strides = [1, 1]} : vector<40x128xf32> to vector<24x128xf32>
    %c0_8 = arith.constant 0 : index
    %c0_9 = arith.constant 0 : index
    %23 = vector.load %arg3[%c0_8, %c0_9] : memref<128x128xf32, #tpu.memory_space<vmem>>, vector<128x128xf32>
    %cst_10 = arith.constant dense<0.000000e+00> : vector<24x128xf32>
    %24 = tpu.matmul %22, %23, %cst_10 {dimension_numbers = #tpu.dot_dimension_numbers<[1], [0], [0], [1], [0, 0, 1, 1], [], []>} : vector<24x128xf32>, vector<128x128xf32>, vector<24x128xf32> -> vector<24x128xf32>
    %c0_11 = arith.constant 0 : index
    %c0_12 = arith.constant 0 : index
    %25 = vector.load %arg4[%c0_11, %c0_12] : memref<128x128xf32, #tpu.memory_space<vmem>>, vector<128x128xf32>
    %cst_13 = arith.constant dense<0.000000e+00> : vector<24x128xf32>
    %26 = tpu.matmul %21, %25, %cst_13 {dimension_numbers = #tpu.dot_dimension_numbers<[1], [0], [0], [1], [0, 0, 1, 1], [], []>} : vector<24x128xf32>, vector<128x128xf32>, vector<24x128xf32> -> vector<24x128xf32>
    %27 = arith.addf %24, %26 : vector<24x128xf32>
    %c0_14 = arith.constant 0 : index
    %c0_15 = arith.constant 0 : index
    %28 = vector.load %arg5[%c0_14, %c0_15] : memref<1x128xf32, #tpu.memory_space<vmem>>, vector<1x128xf32>
    %29 = vector.broadcast %28 : vector<1x128xf32> to vector<24x128xf32>
    %30 = arith.addf %27, %29 : vector<24x128xf32>
    %cst_16 = arith.constant 0.000000e+00 : f32
    %31 = vector.broadcast %cst_16 : f32 to vector<24x128xf32>
    %32 = arith.maximumf %30, %31 : vector<24x128xf32>
    %c0_17 = arith.constant 0 : index
    %c0_18 = arith.constant 0 : index
    %33 = vector.load %arg6[%c0_17, %c0_18] : memref<1x128xi32, #tpu.memory_space<vmem>>, vector<1x128xi32>
    %c0_19 = arith.constant 0 : index
    %c0_20 = arith.constant 0 : index
    %34 = vector.load %arg7[%c0_19, %c0_20] : memref<1x128xi32, #tpu.memory_space<vmem>>, vector<1x128xi32>
    %35 = tpu.iota {dimensions = array<i32: 0>} : vector<24x128xi32>
    %36 = vector.broadcast %33 : vector<1x128xi32> to vector<24x128xi32>
    %37 = arith.cmpi eq, %35, %36 : vector<24x128xi32>
    %38 = arith.extui %37 : vector<24x128xi1> to vector<24x128xi32>
    %39 = arith.sitofp %38 : vector<24x128xi32> to vector<24x128xf32>
    %40 = tpu.iota {dimensions = array<i32: 0>} : vector<8x128xi32>
    %41 = vector.broadcast %34 : vector<1x128xi32> to vector<8x128xi32>
    %42 = arith.cmpi eq, %40, %41 : vector<8x128xi32>
    %43 = arith.extui %42 : vector<8x128xi1> to vector<8x128xi32>
    %44 = arith.sitofp %43 : vector<8x128xi32> to vector<8x128xf32>
    %cst_21 = arith.constant dense<0.000000e+00> : vector<8x24xf32>
    %45 = tpu.matmul %44, %39, %cst_21 {dimension_numbers = #tpu.dot_dimension_numbers<[1], [1], [0], [0], [0, 0, 1, 0], [], []>} : vector<8x128xf32>, vector<24x128xf32>, vector<8x24xf32> -> vector<8x24xf32>
    %cst_22 = arith.constant dense<0.000000e+00> : vector<8xf32>
    %46 = vector.multi_reduction <add>, %45, %cst_22 [1] : vector<8x24xf32> to vector<8xf32>
    %47 = vector.shape_cast %46 : vector<8xf32> to vector<8x1xf32>
    %cst_23 = arith.constant 1.000000e+00 : f32
    %48 = vector.broadcast %cst_23 : f32 to vector<8x1xf32>
    %49 = arith.maximumf %47, %48 : vector<8x1xf32>
    %50 = tpu.reciprocal %49 : vector<8x1xf32> -> vector<8x1xf32>
    %51 = vector.broadcast %50 : vector<8x1xf32> to vector<8x24xf32>
    %52 = arith.mulf %45, %51 : vector<8x24xf32>
    %cst_24 = arith.constant dense<0.000000e+00> : vector<8x128xf32>
    %53 = tpu.matmul %52, %32, %cst_24 {dimension_numbers = #tpu.dot_dimension_numbers<[1], [0], [0], [1], [0, 0, 1, 1], [], []>} : vector<8x24xf32>, vector<24x128xf32>, vector<8x128xf32> -> vector<8x128xf32>
    %54 = vector.extract_strided_slice %32 {offsets = [0, 0], sizes = [8, 128], strides = [1, 1]} : vector<24x128xf32> to vector<8x128xf32>
    %c0_25 = arith.constant 0 : index
    %c0_26 = arith.constant 0 : index
    %55 = vector.load %arg8[%c0_25, %c0_26] : memref<128x128xf32, #tpu.memory_space<vmem>>, vector<128x128xf32>
    %cst_27 = arith.constant dense<0.000000e+00> : vector<8x128xf32>
    %56 = tpu.matmul %54, %55, %cst_27 {dimension_numbers = #tpu.dot_dimension_numbers<[1], [0], [0], [1], [0, 0, 1, 1], [], []>} : vector<8x128xf32>, vector<128x128xf32>, vector<8x128xf32> -> vector<8x128xf32>
    %c0_28 = arith.constant 0 : index
    %c0_29 = arith.constant 0 : index
    %57 = vector.load %arg9[%c0_28, %c0_29] : memref<128x128xf32, #tpu.memory_space<vmem>>, vector<128x128xf32>
    %cst_30 = arith.constant dense<0.000000e+00> : vector<8x128xf32>
    %58 = tpu.matmul %53, %57, %cst_30 {dimension_numbers = #tpu.dot_dimension_numbers<[1], [0], [0], [1], [0, 0, 1, 1], [], []>} : vector<8x128xf32>, vector<128x128xf32>, vector<8x128xf32> -> vector<8x128xf32>
    %59 = arith.addf %56, %58 : vector<8x128xf32>
    %c0_31 = arith.constant 0 : index
    %c0_32 = arith.constant 0 : index
    %60 = vector.load %arg10[%c0_31, %c0_32] : memref<1x128xf32, #tpu.memory_space<vmem>>, vector<1x128xf32>
    %61 = vector.broadcast %60 : vector<1x128xf32> to vector<8x128xf32>
    %62 = arith.addf %59, %61 : vector<8x128xf32>
    %c0_33 = arith.constant 0 : index
    %c0_34 = arith.constant 0 : index
    %63 = vector.load %arg11[%c0_33, %c0_34] : memref<8x128xf32, #tpu.memory_space<vmem>>, vector<8x128xf32>
    tpu.vector_store %arg11[%c0_33, %c0_34], %62 {strides = array<i32>} : memref<8x128xf32, #tpu.memory_space<vmem>>, vector<8x128xf32>,
    return
  }
}

</mosaic_0001>

<llo_original>
// kernel: tpu_custom_call.1
$region0: #{tpu_custom_call.1}
  #allocation0 [shape = 'u32[]', space=smem, size = 0x4, offset = 0x4, fixed_abs, tag = 'smem constant byte address 0x4 - core index']
  #allocation1 [shape = 'u32[144,128]{1,0:T(1,128)}', space=vmem, size = 0x12000, scoped, tag = 'internal scratch']
  %s0 = inlined_call_operand.hbm [shape: f32[40,128], index: 0, kind: input, shape index: {}]
  %s1 = inlined_call_operand.vmem [shape: s32[1,128], index: 1, kind: input, shape index: {}]
  %s2 = inlined_call_operand.vmem [shape: s32[1,128], index: 2, kind: input, shape index: {}]
  %s3 = inlined_call_operand.hbm [shape: f32[128,128], index: 3, kind: input, shape index: {}]
  %s4 = inlined_call_operand.hbm [shape: f32[128,128], index: 4, kind: input, shape index: {}]
  %s5 = inlined_call_operand.vmem [shape: f32[1,128], index: 5, kind: input, shape index: {}]
  %s6 = inlined_call_operand.vmem [shape: s32[1,128], index: 6, kind: input, shape index: {}]
  %s7 = inlined_call_operand.vmem [shape: s32[1,128], index: 7, kind: input, shape index: {}]
  %s8 = inlined_call_operand.hbm [shape: f32[128,128], index: 8, kind: input, shape index: {}]
  %s9 = inlined_call_operand.hbm [shape: f32[128,128], index: 9, kind: input, shape index: {}]
  %s10 = inlined_call_operand.vmem [shape: f32[1,128], index: 10, kind: input, shape index: {}]
  %s11 = inlined_call_operand.hbm [shape: f32[8,128], index: 11, kind: output, shape index: {}]
  %s12 = sld [smem:[#allocation0]]
  $region74: #{tpu_custom_call.1} parent=0
    _
  %s14 = ssub.s32 1, %s12
  %s15 = scalar_select 0, %s14, %s12
  $region1: #{tpu_custom_call.1} parent=0
    #allocation2 [shape = 'u8[20480]{0}', space=vmem, size = 0x5000, scoped, tag = 'input window, operand 0, single buffered']
    #allocation3 [shape = 's32[1]{0}', space=sflag, size = 0x4, scoped, tag = 'scoped memory for tpu_custom_call.1']
    #allocation4 [shape = 's32[1]{0}', space=sflag, size = 0x4, scoped, tag = 'scoped memory for tpu_custom_call.1']
    #allocation5 [shape = 'u8[65536]{0}', space=vmem, size = 0x10000, scoped, tag = 'input window, operand 3, single buffered']
    #allocation6 [shape = 's32[1]{0}', space=sflag, size = 0x4, scoped, tag = 'scoped memory for tpu_custom_call.1']
    #allocation7 [shape = 'u8[65536]{0}', space=vmem, size = 0x10000, scoped, tag = 'input window, operand 4, single buffered']
    #allocation8 [shape = 'u8[65536]{0}', space=vmem, size = 0x10000, scoped, tag = 'input window, operand 8, single buffered']
    #allocation9 [shape = 's32[1]{0}', space=sflag, size = 0x4, scoped, tag = 'scoped memory for tpu_custom_call.1']
    #allocation10 [shape = 'u8[65536]{0}', space=vmem, size = 0x10000, scoped, tag = 'input window, operand 9, single buffered']
    #allocation11 [shape = 'u8[4096]{0}', space=vmem, size = 0x1000, scoped, tag = 'output window, operand 0, single buffered']
    %16 = vsyncpa [#allocation3], 0
    %17 = vsyncpa [#allocation6], 0
    %18 = vsyncpa [#allocation9], 0
    %19 = vsyncpa [#allocation4], 0
    // Predicated region
    $region2: #{tpu_custom_call.1} parent=1 // pred_check
      _
    $region3: #{tpu_custom_call.1} parent=1 // pred_check_branch
      %21 = sbr.rel (0) target = $region5
    $region4: #{tpu_custom_call.1} parent=1 // pred_region
      %s23 = ssub.s32 640, 640
      %24 = vsyncadd [#allocation3], %s23
      %s25 = sshll.u32 [#allocation2], 4
      %s26 = int_to_ptr.vmem [resolvable:$true] %s25
      %31 = dma.hbm_to_vmem [thread:$0]  %s0, 640, %s26, [#allocation3], 128, 128, 8
    $region5: #{tpu_custom_call.1} parent=1 // pred_fallthru
      _
    // Predicated region
    $region6: #{tpu_custom_call.1} parent=1 // pred_check
      _
    $region7: #{tpu_custom_call.1} parent=1 // pred_check_branch
      %33 = sbr.rel (0) target = $region9
    $region8: #{tpu_custom_call.1} parent=1 // pred_region
      _
    $region9: #{tpu_custom_call.1} parent=1 // pred_fallthru
      _
    // Predicated region
    $region10: #{tpu_custom_call.1} parent=1 // pred_check
      _
    $region11: #{tpu_custom_call.1} parent=1 // pred_check_branch
      %35 = sbr.rel (0) target = $region13
    $region12: #{tpu_custom_call.1} parent=1 // pred_region
      _
    $region13: #{tpu_custom_call.1} parent=1 // pred_fallthru
      _
    // Predicated region
    $region14: #{tpu_custom_call.1} parent=1 // pred_check
      _
    $region15: #{tpu_custom_call.1} parent=1 // pred_check_branch
      %37 = sbr.rel (0) target = $region17
    $region16: #{tpu_custom_call.1} parent=1 // pred_region
      %s39 = ssub.s32 2048, 2048
      %40 = vsyncadd [#allocation6], %s39
      %s41 = sshll.u32 [#allocation5], 4
      %s42 = int_to_ptr.vmem [resolvable:$true] %s41
      %47 = dma.hbm_to_vmem [thread:$0]  %s3, 2048, %s42, [#allocation6], 128, 128, 8
    $region17: #{tpu_custom_call.1} parent=1 // pred_fallthru
      _
    // Predicated region
    $region18: #{tpu_custom_call.1} parent=1 // pred_check
      _
    $region19: #{tpu_custom_call.1} parent=1 // pred_check_branch
      %49 = sbr.rel (0) target = $region21
    $region20: #{tpu_custom_call.1} parent=1 // pred_region
      %s51 = ssub.s32 2048, 2048
      %52 = vsyncadd [#allocation6], %s51
      %s53 = sshll.u32 [#allocation7], 4
      %s54 = int_to_ptr.vmem [resolvable:$true] %s53
      %59 = dma.hbm_to_vmem [thread:$0]  %s4, 2048, %s54, [#allocation6], 128, 128, 8
    $region21: #{tpu_custom_call.1} parent=1 // pred_fallthru
      _
    // Predicated region
    $region22: #{tpu_custom_call.1} parent=1 // pred_check
      _
    $region23: #{tpu_custom_call.1} parent=1 // pred_check_branch
      %61 = sbr.rel (0) target = $region25
    $region24: #{tpu_custom_call.1} parent=1 // pred_region
      _
    $region25: #{tpu_custom_call.1} parent=1 // pred_fallthru
      _
    // Predicated region
    $region26: #{tpu_custom_call.1} parent=1 // pred_check
      _
    $region27: #{tpu_custom_call.1} parent=1 // pred_check_branch
      %63 = sbr.rel (0) target = $region29
    $region28: #{tpu_custom_call.1} parent=1 // pred_region
      _
    $region29: #{tpu_custom_call.1} parent=1 // pred_fallthru
      _
    // Predicated region
    $region30: #{tpu_custom_call.1} parent=1 // pred_check
      _
    $region31: #{tpu_custom_call.1} parent=1 // pred_check_branch
      %65 = sbr.rel (0) target = $region33
    $region32: #{tpu_custom_call.1} parent=1 // pred_region
      _
    $region33: #{tpu_custom_call.1} parent=1 // pred_fallthru
      _
    // Predicated region
    $region34: #{tpu_custom_call.1} parent=1 // pred_check
      _
    $region35: #{tpu_custom_call.1} parent=1 // pred_check_branch
      %67 = sbr.rel (0) target = $region37
    $region36: #{tpu_custom_call.1} parent=1 // pred_region
      %s69 = ssub.s32 2048, 2048
      %70 = vsyncadd [#allocation9], %s69
      %s71 = sshll.u32 [#allocation8], 4
      %s72 = int_to_ptr.vmem [resolvable:$true] %s71
      %77 = dma.hbm_to_vmem [thread:$0]  %s8, 2048, %s72, [#allocation9], 128, 128, 8
    $region37: #{tpu_custom_call.1} parent=1 // pred_fallthru
      _
    // Predicated region
    $region38: #{tpu_custom_call.1} parent=1 // pred_check
      _
    $region39: #{tpu_custom_call.1} parent=1 // pred_check_branch
      %79 = sbr.rel (0) target = $region41
    $region40: #{tpu_custom_call.1} parent=1 // pred_region
      %s81 = ssub.s32 2048, 2048
      %82 = vsyncadd [#allocation9], %s81
      %s83 = sshll.u32 [#allocation10], 4
      %s84 = int_to_ptr.vmem [resolvable:$true] %s83
      %89 = dma.hbm_to_vmem [thread:$0]  %s9, 2048, %s84, [#allocation9], 128, 128, 8
    $region41: #{tpu_custom_call.1} parent=1 // pred_fallthru
      _
    // Predicated region
    $region42: #{tpu_custom_call.1} parent=1 // pred_check
      _
    $region43: #{tpu_custom_call.1} parent=1 // pred_check_branch
      %91 = sbr.rel (0) target = $region45
    $region44: #{tpu_custom_call.1} parent=1 // pred_region
      _
    $region45: #{tpu_custom_call.1} parent=1 // pred_fallthru
      _
    // Predicated region
    $region46: #{tpu_custom_call.1} parent=1 // pred_check
      _
    $region47: #{tpu_custom_call.1} parent=1 // pred_check_branch
      %93 = sbr.rel (0) target = $region49
    $region48: #{tpu_custom_call.1} parent=1 // pred_region
      %94 = dma.done [#allocation3], 640
    $region49: #{tpu_custom_call.1} parent=1 // pred_fallthru
      _
    // Predicated region
    $region50: #{tpu_custom_call.1} parent=1 // pred_check
      _
    $region51: #{tpu_custom_call.1} parent=1 // pred_check_branch
      %96 = sbr.rel (0) target = $region53
    $region52: #{tpu_custom_call.1} parent=1 // pred_region
      %97 = dma.done [#allocation6], 2048
    $region53: #{tpu_custom_call.1} parent=1 // pred_fallthru
      _
    // Predicated region
    $region54: #{tpu_custom_call.1} parent=1 // pred_check
      _
    $region55: #{tpu_custom_call.1} parent=1 // pred_check_branch
      %99 = sbr.rel (0) target = $region57
    $region56: #{tpu_custom_call.1} parent=1 // pred_region
      %100 = dma.done [#allocation6], 2048
    $region57: #{tpu_custom_call.1} parent=1 // pred_fallthru
      _
    // Predicated region
    $region58: #{tpu_custom_call.1} parent=1 // pred_check
      _
    $region59: #{tpu_custom_call.1} parent=1 // pred_check_branch
      %102 = sbr.rel (0) target = $region61
    $region60: #{tpu_custom_call.1} parent=1 // pred_region
      %103 = dma.done [#allocation9], 2048
    $region61: #{tpu_custom_call.1} parent=1 // pred_fallthru
      _
    // Predicated region
    $region62: #{tpu_custom_call.1} parent=1 // pred_check
      _
    $region63: #{tpu_custom_call.1} parent=1 // pred_check_branch
      %105 = sbr.rel (0) target = $region65
    $region64: #{tpu_custom_call.1} parent=1 // pred_region
      %106 = dma.done [#allocation9], 2048
    $region65: #{tpu_custom_call.1} parent=1 // pred_fallthru
      _
    %v107 = vld [vmem:[#allocation2] sm:$0xff]
    %v108 = vld [vmem:[#allocation2 + $0x8] sm:$0xff]
    %v109 = vld [vmem:[#allocation2 + $0x10] sm:$0xff]
    %v110 = vld [vmem:[#allocation2 + $0x18] sm:$0xff]
    %v111 = vld [vmem:[#allocation2 + $0x20] sm:$0xff]
    %v112 = vld [vmem:[%s1] sm:$0x1]
    %v113 = vld [vmem:[%s2] sm:$0x1]
    %v114 = vlaneseq
    %v115 = vshrl.u32 %v114, 7
    %v116 = vadd.s32 %v115, 8
    %v117 = vadd.s32 %v115, 16
    %v118 = vadd.s32 %v115, 24
    %v119 = vadd.s32 %v115, 32
    %v120 = vlaneseq
    %v121 = vshrl.u32 %v120, 7
    %v122 = vsub.s32 0, %v121
    %v123 = vrot.slane %v112, %v122
    %vm124 = vcmp.eq.s32.totalorder %v115, %v123
    %vm125 = vcmp.eq.s32.totalorder %v116, %v123
    %vm126 = vcmp.eq.s32.totalorder %v117, %v123
    %vm127 = vcmp.eq.s32.totalorder %v118, %v123
    %vm128 = vcmp.eq.s32.totalorder %v119, %v123
    %v129 = vsel %vm124, 1, 0
    %v130 = vsel %vm125, 1, 0
    %v131 = vsel %vm126, 1, 0
    %v132 = vsel %vm127, 1, 0
    %v133 = vsel %vm128, 1, 0
    %v134 = vcvt.s32.f32 %v129
    %v135 = vcvt.s32.f32 %v130
    %v136 = vcvt.s32.f32 %v131
    %v137 = vcvt.s32.f32 %v132
    %v138 = vcvt.s32.f32 %v133
    %v139 = vlaneseq
    %v140 = vshrl.u32 %v139, 7
    %v141 = vsub.s32 0, %v140
    %v142 = vrot.slane %v113, %v141
    %vm143 = vcmp.eq.s32.totalorder %v115, %v142
    %vm144 = vcmp.eq.s32.totalorder %v116, %v142
    %vm145 = vcmp.eq.s32.totalorder %v117, %v142
    %v146 = vsel %vm143, 1, 0
    %v147 = vsel %vm144, 1, 0
    %v148 = vsel %vm145, 1, 0
    %v149 = vcvt.s32.f32 %v146
    %v150 = vcvt.s32.f32 %v147
    %v151 = vcvt.s32.f32 %v148
    %152 = vmatprep.subr.mxu0 0.0
    %153 = vmatpush1.xpose.msra.mxu0 %v134
    %154 = vmatprep.subr.mxu0 0.0
    %155 = vmatpush1.xpose.msra.mxu0 %v135
    %156 = vmatprep.subr.mxu0 0.0
    %157 = vmatpush1.xpose.msra.mxu0 %v136
    %158 = vmatprep.subr.mxu0 0.0
    %159 = vmatpush1.xpose.msra.mxu0 %v137
    %160 = vmatprep.subr.mxu0 0.0
    %161 = vmatpush1.xpose.msra.mxu0 %v138
    %162 = vmatprep.subr.mxu0 0.0
    %163 = vmatpush1.xpose.msra.mxu0 0.0
    %164 = vmatprep.subr.mxu0 0.0
    %165 = vmatpush1.xpose.msra.mxu0 0.0
    %166 = vmatprep.subr.mxu0 0.0
    %167 = vmatpush1.xpose.msra.mxu0 0.0
    %168 = vmatprep.subr.mxu0 0.0
    %169 = vmatpush1.xpose.msra.mxu0 0.0
    %170 = vmatprep.subr.mxu0 0.0
    %171 = vmatpush1.xpose.msra.mxu0 0.0
    %172 = vmatprep.subr.mxu0 0.0
    %173 = vmatpush1.xpose.msra.mxu0 0.0
    %174 = vmatprep.subr.mxu0 0.0
    %175 = vmatpush1.xpose.msra.mxu0 0.0
    %176 = vmatprep.subr.mxu0 0.0
    %177 = vmatpush1.xpose.msra.mxu0 0.0
    %178 = vmatprep.subr.mxu0 0.0
    %179 = vmatpush1.xpose.msra.mxu0 0.0
    %180 = vmatprep.subr.mxu0 0.0
    %181 = vmatpush1.xpose.msra.mxu0 0.0
    %182 = vmatprep.subr.mxu0 0.0
    %183 = vmatpush1.xpose.msra.mxu0 0.0
    %184 = vmatprep.subr.mxu0 0.0
    %185 = vmatpush1.xpose.msra.mxu0 0.0
    %186 = vmatprep.subr.mxu0 0.0
    %187 = vmatpush1.xpose.msra.mxu0 0.0
    %188 = vmatprep.subr.mxu0 0.0
    %189 = vmatpush1.xpose.msra.mxu0 0.0
    %190 = vmatprep.subr.mxu0 0.0
    %191 = vmatpush1.xpose.msra.mxu0 0.0
    %192 = vmatprep.subr.mxu0 0.0
    %193 = vmatpush1.xpose.msra.mxu0 0.0
    %194 = vmatprep.subr.mxu0 0.0
    %195 = vmatpush1.xpose.msra.mxu0 0.0
    %196 = vmatprep.subr.mxu0 0.0
    %197 = vmatpush1.xpose.msra.mxu0 0.0
    %198 = vmatprep.subr.mxu0 0.0
    %199 = vmatpush1.xpose.msra.mxu0 0.0
    %200 = vmatprep.subr.mxu0 0.0
    %201 = vmatpush1.xpose.msra.mxu0 0.0
    %202 = vmatprep.subr.mxu0 0.0
    %203 = vmatpush1.xpose.msra.mxu0 0.0
    %204 = vmatprep.subr.mxu0 0.0
    %205 = vmatpush1.xpose.msra.mxu0 0.0
    %206 = vmatprep.subr.mxu0 0.0
    %207 = vmatpush1.xpose.msra.mxu0 0.0
    %208 = vmatprep.subr.mxu0 0.0
    %209 = vmatpush1.xpose.msra.mxu0 0.0
    %210 = vmatprep.subr.mxu0 0.0
    %211 = vmatpush1.xpose.msra.mxu0 0.0
    %212 = vmatprep.subr.mxu0 0.0
    %213 = vmatpush1.xpose.msra.mxu0 0.0
    %214 = vmatprep.subr.mxu0 0.0
    %215 = vmatpush1.xpose.msra.mxu0 0.0
    %216 = vmatprep.mubr.f32.mxu0 0.0
    %217 = vmatmul.mubr.f32.gmra.mrb[0].mxu0 %v149
    %v218 = vpop.f32.mrb[0].mxu0
    %v219 = vadd.f32 0.0, %v218
    %v220 = vpop.f32.mrb[0].mxu0
    %221 = vmatprep.mubr.f32.mxu0 0.0
    %222 = vmatmul.mubr.f32.gmra.mrb[0].mxu0 %v150
    %v223 = vpop.f32.mrb[0].mxu0
    %v224 = vadd.f32 0.0, %v223
    %v225 = vpop.f32.mrb[0].mxu0
    %226 = vmatprep.mubr.f32.mxu0 0.0
    %227 = vmatmul.mubr.f32.gmra.mrb[0].mxu0 %v151
    %v228 = vpop.f32.mrb[0].mxu0
    %v229 = vadd.f32 0.0, %v228
    %v230 = vpop.f32.mrb[0].mxu0
    %231 = vdwg.mxu0
    %vm232 = vcmask 326656
    %v233 = vsel %vm232, %v219, 0.0
    %234 = vadd.xlane.f32.xlu0 %v233
    %v235 = vpop.xlane.xlu0 %234
    %v236 = vsel %vm232, %v224, 0.0
    %237 = vadd.xlane.f32.xlu0 %v236
    %v238 = vpop.xlane.xlu0 %237
    %v239 = vsel %vm232, %v229, 0.0
    %240 = vadd.xlane.f32.xlu0 %v239
    %v241 = vpop.xlane.xlu0 %240
    %v242 = vmax.f32 %v235, 1.0
    %v243 = vmax.f32 %v238, 1.0
    %v244 = vmax.f32 %v241, 1.0
    %v245 = vrcp.pop %v242
    %v246 = vrcp.pop %v243
    %v247 = vrcp.pop %v244
    %v248 = vmul.f32 %v219, %v245
    %v249 = vmul.f32 %v224, %v246
    %v250 = vmul.f32 %v229, %v247
    %v252 = vsel %vm232, %v248, 0
    %v255 = vsel %vm232, %v249, 0
    %v258 = vsel %vm232, %v250, 0
    %260 = vmatprep.subr.mxu0 0.0
    %261 = vmatpush1.msra.mxu0 %v107
    %262 = vmatprep.subr.mxu0 0.0
    %263 = vmatpush1.msra.mxu0 %v108
    %264 = vmatprep.subr.mxu0 0.0
    %265 = vmatpush1.msra.mxu0 %v109
    %266 = vmatprep.subr.mxu0 0.0
    %267 = vmatpush1.msra.mxu0 %v110
    %268 = vmatprep.subr.mxu0 0.0
    %269 = vmatpush1.msra.mxu0 %v111
    %270 = vmatprep.subr.mxu0 0.0
    %271 = vmatpush1.msra.mxu0 0.0
    %272 = vmatprep.subr.mxu0 0.0
    %273 = vmatpush1.msra.mxu0 0.0
    %274 = vmatprep.subr.mxu0 0.0
    %275 = vmatpush1.msra.mxu0 0.0
    %276 = vmatprep.subr.mxu0 0.0
    %277 = vmatpush1.msra.mxu0 0.0
    %278 = vmatprep.subr.mxu0 0.0
    %279 = vmatpush1.msra.mxu0 0.0
    %280 = vmatprep.subr.mxu0 0.0
    %281 = vmatpush1.msra.mxu0 0.0
    %282 = vmatprep.subr.mxu0 0.0
    %283 = vmatpush1.msra.mxu0 0.0
    %284 = vmatprep.subr.mxu0 0.0
    %285 = vmatpush1.msra.mxu0 0.0
    %286 = vmatprep.subr.mxu0 0.0
    %287 = vmatpush1.msra.mxu0 0.0
    %288 = vmatprep.subr.mxu0 0.0
    %289 = vmatpush1.msra.mxu0 0.0
    %290 = vmatprep.subr.mxu0 0.0
    %291 = vmatpush1.msra.mxu0 0.0
    %292 = vmatprep.subr.mxu0 0.0
    %293 = vmatpush1.msra.mxu0 0.0
    %294 = vmatprep.subr.mxu0 0.0
    %295 = vmatpush1.msra.mxu0 0.0
    %296 = vmatprep.subr.mxu0 0.0
    %297 = vmatpush1.msra.mxu0 0.0
    %298 = vmatprep.subr.mxu0 0.0
    %299 = vmatpush1.msra.mxu0 0.0
    %300 = vmatprep.subr.mxu0 0.0
    %301 = vmatpush1.msra.mxu0 0.0
    %302 = vmatprep.subr.mxu0 0.0
    %303 = vmatpush1.msra.mxu0 0.0
    %304 = vmatprep.subr.mxu0 0.0
    %305 = vmatpush1.msra.mxu0 0.0
    %306 = vmatprep.subr.mxu0 0.0
    %307 = vmatpush1.msra.mxu0 0.0
    %308 = vmatprep.subr.mxu0 0.0
    %309 = vmatpush1.msra.mxu0 0.0
    %310 = vmatprep.subr.mxu0 0.0
    %311 = vmatpush1.msra.mxu0 0.0
    %312 = vmatprep.subr.mxu0 0.0
    %313 = vmatpush1.msra.mxu0 0.0
    %314 = vmatprep.subr.mxu0 0.0
    %315 = vmatpush1.msra.mxu0 0.0
    %316 = vmatprep.subr.mxu0 0.0
    %317 = vmatpush1.msra.mxu0 0.0
    %318 = vmatprep.subr.mxu0 0.0
    %319 = vmatpush1.msra.mxu0 0.0
    %320 = vmatprep.subr.mxu0 0.0
    %321 = vmatpush1.msra.mxu0 0.0
    %322 = vmatprep.subr.mxu0 0.0
    %323 = vmatpush1.msra.mxu0 0.0
    %324 = vmatprep.mubr.f32.mxu0 0.0
    %325 = vmatmul.mubr.f32.gmra.mrb[0].mxu0 %v252
    %v326 = vpop.f32.mrb[0].mxu0
    %v327 = vadd.f32 0.0, %v326
    %v328 = vpop.f32.mrb[0].mxu0
    %329 = vmatprep.mubr.f32.mxu0 0.0
    %330 = vmatmul.mubr.f32.gmra.mrb[0].mxu0 %v255
    %v331 = vpop.f32.mrb[0].mxu0
    %v332 = vadd.f32 0.0, %v331
    %v333 = vpop.f32.mrb[0].mxu0
    %334 = vmatprep.mubr.f32.mxu0 0.0
    %335 = vmatmul.mubr.f32.gmra.mrb[0].mxu0 %v258
    %v336 = vpop.f32.mrb[0].mxu0
    %v337 = vadd.f32 0.0, %v336
    %v338 = vpop.f32.mrb[0].mxu0
    %339 = vdwg.mxu0
    %v340 = vld [vmem:[#allocation5] sm:$0xff]
    %v341 = vld [vmem:[#allocation5 + $0x8] sm:$0xff]
    %v342 = vld [vmem:[#allocation5 + $0x10] sm:$0xff]
    %v343 = vld [vmem:[#allocation5 + $0x18] sm:$0xff]
    %v344 = vld [vmem:[#allocation5 + $0x20] sm:$0xff]
    %v345 = vld [vmem:[#allocation5 + $0x28] sm:$0xff]
    %v346 = vld [vmem:[#allocation5 + $0x30] sm:$0xff]
    %v347 = vld [vmem:[#allocation5 + $0x38] sm:$0xff]
    %v348 = vld [vmem:[#allocation5 + $0x40] sm:$0xff]
    %v349 = vld [vmem:[#allocation5 + $0x48] sm:$0xff]
    %v350 = vld [vmem:[#allocation5 + $0x50] sm:$0xff]
    %v351 = vld [vmem:[#allocation5 + $0x58] sm:$0xff]
    %v352 = vld [vmem:[#allocation5 + $0x60] sm:$0xff]
    %v353 = vld [vmem:[#allocation5 + $0x68] sm:$0xff]
    %v354 = vld [vmem:[#allocation5 + $0x70] sm:$0xff]
    %v355 = vld [vmem:[#allocation5 + $0x78] sm:$0xff]
    %v356 = vld [vmem:[#allocation7] sm:$0xff]
    %v357 = vld [vmem:[#allocation7 + $0x8] sm:$0xff]
    %v358 = vld [vmem:[#allocation7 + $0x10] sm:$0xff]
    %v359 = vld [vmem:[#allocation7 + $0x18] sm:$0xff]
    %v360 = vld [vmem:[#allocation7 + $0x20] sm:$0xff]
    %v361 = vld [vmem:[#allocation7 + $0x28] sm:$0xff]
    %v362 = vld [vmem:[#allocation7 + $0x30] sm:$0xff]
    %v363 = vld [vmem:[#allocation7 + $0x38] sm:$0xff]
    %v364 = vld [vmem:[#allocation7 + $0x40] sm:$0xff]
    %v365 = vld [vmem:[#allocation7 + $0x48] sm:$0xff]
    %v366 = vld [vmem:[#allocation7 + $0x50] sm:$0xff]
    %v367 = vld [vmem:[#allocation7 + $0x58] sm:$0xff]
    %v368 = vld [vmem:[#allocation7 + $0x60] sm:$0xff]
    %v369 = vld [vmem:[#allocation7 + $0x68] sm:$0xff]
    %v370 = vld [vmem:[#allocation7 + $0x70] sm:$0xff]
    %v371 = vld [vmem:[#allocation7 + $0x78] sm:$0xff]
    %372 = vmatprep.subr.mxu0 0.0
    %373 = vmatpush1.msra.mxu0 %v356
    %374 = vmatprep.subr.mxu0 0.0
    %375 = vmatpush1.msra.mxu0 %v357
    %376 = vmatprep.subr.mxu0 0.0
    %377 = vmatpush1.msra.mxu0 %v358
    %378 = vmatprep.subr.mxu0 0.0
    %379 = vmatpush1.msra.mxu0 %v359
    %380 = vmatprep.subr.mxu0 0.0
    %381 = vmatpush1.msra.mxu0 %v360
    %382 = vmatprep.subr.mxu0 0.0
    %383 = vmatpush1.msra.mxu0 %v361
    %384 = vmatprep.subr.mxu0 0.0
    %385 = vmatpush1.msra.mxu0 %v362
    %386 = vmatprep.subr.mxu0 0.0
    %387 = vmatpush1.msra.mxu0 %v363
    %388 = vmatprep.subr.mxu0 0.0
    %389 = vmatpush1.msra.mxu0 %v364
    %390 = vmatprep.subr.mxu0 0.0
    %391 = vmatpush1.msra.mxu0 %v365
    %392 = vmatprep.subr.mxu0 0.0
    %393 = vmatpush1.msra.mxu0 %v366
    %394 = vmatprep.subr.mxu0 0.0
    %395 = vmatpush1.msra.mxu0 %v367
    %396 = vmatprep.subr.mxu0 0.0
    %397 = vmatpush1.msra.mxu0 %v368
    %398 = vmatprep.subr.mxu0 0.0
    %399 = vmatpush1.msra.mxu0 %v369
    %400 = vmatprep.subr.mxu0 0.0
    %401 = vmatpush1.msra.mxu0 %v370
    %402 = vmatprep.subr.mxu0 0.0
    %403 = vmatpush1.msra.mxu0 %v371
    %404 = vmatprep.subr.mxu0 0.0
    %405 = vmatpush1.msra.mxu0 0.0
    %406 = vmatprep.subr.mxu0 0.0
    %407 = vmatpush1.msra.mxu0 0.0
    %408 = vmatprep.subr.mxu0 0.0
    %409 = vmatpush1.msra.mxu0 0.0
    %410 = vmatprep.subr.mxu0 0.0
    %411 = vmatpush1.msra.mxu0 0.0
    %412 = vmatprep.subr.mxu0 0.0
    %413 = vmatpush1.msra.mxu0 0.0
    %414 = vmatprep.subr.mxu0 0.0
    %415 = vmatpush1.msra.mxu0 0.0
    %416 = vmatprep.subr.mxu0 0.0
    %417 = vmatpush1.msra.mxu0 0.0
    %418 = vmatprep.subr.mxu0 0.0
    %419 = vmatpush1.msra.mxu0 0.0
    %420 = vmatprep.subr.mxu0 0.0
    %421 = vmatpush1.msra.mxu0 0.0
    %422 = vmatprep.subr.mxu0 0.0
    %423 = vmatpush1.msra.mxu0 0.0
    %424 = vmatprep.subr.mxu0 0.0
    %425 = vmatpush1.msra.mxu0 0.0
    %426 = vmatprep.subr.mxu0 0.0
    %427 = vmatpush1.msra.mxu0 0.0
    %428 = vmatprep.subr.mxu0 0.0
    %429 = vmatpush1.msra.mxu0 0.0
    %430 = vmatprep.subr.mxu0 0.0
    %431 = vmatpush1.msra.mxu0 0.0
    %432 = vmatprep.subr.mxu0 0.0
    %433 = vmatpush1.msra.mxu0 0.0
    %434 = vmatprep.subr.mxu0 0.0
    %435 = vmatpush1.msra.mxu0 0.0
    %436 = vmatprep.mubr.f32.mxu0 0.0
    %437 = vmatmul.mubr.f32.gmra.mrb[0].mxu0 %v327
    %v438 = vpop.f32.mrb[0].mxu0
    %v439 = vadd.f32 0.0, %v438
    %v440 = vpop.f32.mrb[0].mxu0
    %441 = vmatprep.mubr.f32.mxu0 0.0
    %442 = vmatmul.mubr.f32.gmra.mrb[0].mxu0 %v332
    %v443 = vpop.f32.mrb[0].mxu0
    %v444 = vadd.f32 0.0, %v443
    %v445 = vpop.f32.mrb[0].mxu0
    %446 = vmatprep.mubr.f32.mxu0 0.0
    %447 = vmatmul.mubr.f32.gmra.mrb[0].mxu0 %v337
    %v448 = vpop.f32.mrb[0].mxu0
    %v449 = vadd.f32 0.0, %v448
    %v450 = vpop.f32.mrb[0].mxu0
    %451 = vdwg.mxu0
    %452 = vmatprep.subr.mxu0 0.0
    %453 = vmatpush1.msra.mxu0 %v340
    %454 = vmatprep.subr.mxu0 0.0
    %455 = vmatpush1.msra.mxu0 %v341
    %456 = vmatprep.subr.mxu0 0.0
    %457 = vmatpush1.msra.mxu0 %v342
    %458 = vmatprep.subr.mxu0 0.0
    %459 = vmatpush1.msra.mxu0 %v343
    %460 = vmatprep.subr.mxu0 0.0
    %461 = vmatpush1.msra.mxu0 %v344
    %462 = vmatprep.subr.mxu0 0.0
    %463 = vmatpush1.msra.mxu0 %v345
    %464 = vmatprep.subr.mxu0 0.0
    %465 = vmatpush1.msra.mxu0 %v346
    %466 = vmatprep.subr.mxu0 0.0
    %467 = vmatpush1.msra.mxu0 %v347
    %468 = vmatprep.subr.mxu0 0.0
    %469 = vmatpush1.msra.mxu0 %v348
    %470 = vmatprep.subr.mxu0 0.0
    %471 = vmatpush1.msra.mxu0 %v349
    %472 = vmatprep.subr.mxu0 0.0
    %473 = vmatpush1.msra.mxu0 %v350
    %474 = vmatprep.subr.mxu0 0.0
    %475 = vmatpush1.msra.mxu0 %v351
    %476 = vmatprep.subr.mxu0 0.0
    %477 = vmatpush1.msra.mxu0 %v352
    %478 = vmatprep.subr.mxu0 0.0
    %479 = vmatpush1.msra.mxu0 %v353
    %480 = vmatprep.subr.mxu0 0.0
    %481 = vmatpush1.msra.mxu0 %v354
    %482 = vmatprep.subr.mxu0 0.0
    %483 = vmatpush1.msra.mxu0 %v355
    %484 = vmatprep.subr.mxu0 0.0
    %485 = vmatpush1.msra.mxu0 0.0
    %486 = vmatprep.subr.mxu0 0.0
    %487 = vmatpush1.msra.mxu0 0.0
    %488 = vmatprep.subr.mxu0 0.0
    %489 = vmatpush1.msra.mxu0 0.0
    %490 = vmatprep.subr.mxu0 0.0
    %491 = vmatpush1.msra.mxu0 0.0
    %492 = vmatprep.subr.mxu0 0.0
    %493 = vmatpush1.msra.mxu0 0.0
    %494 = vmatprep.subr.mxu0 0.0
    %495 = vmatpush1.msra.mxu0 0.0
    %496 = vmatprep.subr.mxu0 0.0
    %497 = vmatpush1.msra.mxu0 0.0
    %498 = vmatprep.subr.mxu0 0.0
    %499 = vmatpush1.msra.mxu0 0.0
    %500 = vmatprep.subr.mxu0 0.0
    %501 = vmatpush1.msra.mxu0 0.0
    %502 = vmatprep.subr.mxu0 0.0
    %503 = vmatpush1.msra.mxu0 0.0
    %504 = vmatprep.subr.mxu0 0.0
    %505 = vmatpush1.msra.mxu0 0.0
    %506 = vmatprep.subr.mxu0 0.0
    %507 = vmatpush1.msra.mxu0 0.0
    %508 = vmatprep.subr.mxu0 0.0
    %509 = vmatpush1.msra.mxu0 0.0
    %510 = vmatprep.subr.mxu0 0.0
    %511 = vmatpush1.msra.mxu0 0.0
    %512 = vmatprep.subr.mxu0 0.0
    %513 = vmatpush1.msra.mxu0 0.0
    %514 = vmatprep.subr.mxu0 0.0
    %515 = vmatpush1.msra.mxu0 0.0
    %516 = vmatprep.mubr.f32.mxu0 0.0
    %517 = vmatmul.mubr.f32.gmra.mrb[0].mxu0 %v107
    %v518 = vpop.f32.mrb[0].mxu0
    %v519 = vadd.f32 %v439, %v518
    %v520 = vpop.f32.mrb[0].mxu0
    %521 = vmatprep.mubr.f32.mxu0 0.0
    %522 = vmatmul.mubr.f32.gmra.mrb[0].mxu0 %v108
    %v523 = vpop.f32.mrb[0].mxu0
    %v524 = vadd.f32 %v444, %v523
    %v525 = vpop.f32.mrb[0].mxu0
    %526 = vmatprep.mubr.f32.mxu0 0.0
    %527 = vmatmul.mubr.f32.gmra.mrb[0].mxu0 %v109
    %v528 = vpop.f32.mrb[0].mxu0
    %v529 = vadd.f32 %v449, %v528
    %v530 = vpop.f32.mrb[0].mxu0
    %531 = vdwg.mxu0
    %v532 = vld [vmem:[%s5] sm:$0x1]
    %v534 = vlaneseq
    %v535 = vshrl.u32 %v534, 7
    %v536 = vsub.s32 0, %v535
    %v537 = vrot.slane %v532, %v536
    %v539 = vadd.f32 %v519, %v537
    %v540 = vadd.f32 %v524, %v537
    %v541 = vadd.f32 %v529, %v537
    %v542 = vmax.f32 %v539, 0.0
    %v543 = vmax.f32 %v540, 0.0
    %v544 = vmax.f32 %v541, 0.0
    %v545 = vld [vmem:[%s6] sm:$0x1]
    %v546 = vld [vmem:[%s7] sm:$0x1]
    %v547 = vlaneseq
    %v548 = vshrl.u32 %v547, 7
    %v549 = vsub.s32 0, %v548
    %v550 = vrot.slane %v545, %v549
    %vm551 = vcmp.eq.s32.totalorder %v115, %v550
    %vm552 = vcmp.eq.s32.totalorder %v116, %v550
    %vm553 = vcmp.eq.s32.totalorder %v117, %v550
    %v554 = vsel %vm551, 1, 0
    %v555 = vsel %vm552, 1, 0
    %v556 = vsel %vm553, 1, 0
    %v557 = vcvt.s32.f32 %v554
    %v558 = vcvt.s32.f32 %v555
    %v559 = vcvt.s32.f32 %v556
    %v560 = vlaneseq
    %v561 = vshrl.u32 %v560, 7
    %v562 = vsub.s32 0, %v561
    %v563 = vrot.slane %v546, %v562
    %vm564 = vcmp.eq.s32.totalorder %v115, %v563
    %v565 = vsel %vm564, 1, 0
    %v566 = vcvt.s32.f32 %v565
    %567 = vmatprep.subr.mxu0 0.0
    %568 = vmatpush1.xpose.msra.mxu0 %v557
    %569 = vmatprep.subr.mxu0 0.0
    %570 = vmatpush1.xpose.msra.mxu0 %v558
    %571 = vmatprep.subr.mxu0 0.0
    %572 = vmatpush1.xpose.msra.mxu0 %v559
    %573 = vmatprep.subr.mxu0 0.0
    %574 = vmatpush1.xpose.msra.mxu0 0.0
    %575 = vmatprep.subr.mxu0 0.0
    %576 = vmatpush1.xpose.msra.mxu0 0.0
    %577 = vmatprep.subr.mxu0 0.0
    %578 = vmatpush1.xpose.msra.mxu0 0.0
    %579 = vmatprep.subr.mxu0 0.0
    %580 = vmatpush1.xpose.msra.mxu0 0.0
    %581 = vmatprep.subr.mxu0 0.0
    %582 = vmatpush1.xpose.msra.mxu0 0.0
    %583 = vmatprep.subr.mxu0 0.0
    %584 = vmatpush1.xpose.msra.mxu0 0.0
    %585 = vmatprep.subr.mxu0 0.0
    %586 = vmatpush1.xpose.msra.mxu0 0.0
    %587 = vmatprep.subr.mxu0 0.0
    %588 = vmatpush1.xpose.msra.mxu0 0.0
    %589 = vmatprep.subr.mxu0 0.0
    %590 = vmatpush1.xpose.msra.mxu0 0.0
    %591 = vmatprep.subr.mxu0 0.0
    %592 = vmatpush1.xpose.msra.mxu0 0.0
    %593 = vmatprep.subr.mxu0 0.0
    %594 = vmatpush1.xpose.msra.mxu0 0.0
    %595 = vmatprep.subr.mxu0 0.0
    %596 = vmatpush1.xpose.msra.mxu0 0.0
    %597 = vmatprep.subr.mxu0 0.0
    %598 = vmatpush1.xpose.msra.mxu0 0.0
    %599 = vmatprep.subr.mxu0 0.0
    %600 = vmatpush1.xpose.msra.mxu0 0.0
    %601 = vmatprep.subr.mxu0 0.0
    %602 = vmatpush1.xpose.msra.mxu0 0.0
    %603 = vmatprep.subr.mxu0 0.0
    %604 = vmatpush1.xpose.msra.mxu0 0.0
    %605 = vmatprep.subr.mxu0 0.0
    %606 = vmatpush1.xpose.msra.mxu0 0.0
    %607 = vmatprep.subr.mxu0 0.0
    %608 = vmatpush1.xpose.msra.mxu0 0.0
    %609 = vmatprep.subr.mxu0 0.0
    %610 = vmatpush1.xpose.msra.mxu0 0.0
    %611 = vmatprep.subr.mxu0 0.0
    %612 = vmatpush1.xpose.msra.mxu0 0.0
    %613 = vmatprep.subr.mxu0 0.0
    %614 = vmatpush1.xpose.msra.mxu0 0.0
    %615 = vmatprep.subr.mxu0 0.0
    %616 = vmatpush1.xpose.msra.mxu0 0.0
    %617 = vmatprep.subr.mxu0 0.0
    %618 = vmatpush1.xpose.msra.mxu0 0.0
    %619 = vmatprep.subr.mxu0 0.0
    %620 = vmatpush1.xpose.msra.mxu0 0.0
    %621 = vmatprep.subr.mxu0 0.0
    %622 = vmatpush1.xpose.msra.mxu0 0.0
    %623 = vmatprep.subr.mxu0 0.0
    %624 = vmatpush1.xpose.msra.mxu0 0.0
    %625 = vmatprep.subr.mxu0 0.0
    %626 = vmatpush1.xpose.msra.mxu0 0.0
    %627 = vmatprep.subr.mxu0 0.0
    %628 = vmatpush1.xpose.msra.mxu0 0.0
    %629 = vmatprep.subr.mxu0 0.0
    %630 = vmatpush1.xpose.msra.mxu0 0.0
    %631 = vmatprep.mubr.f32.mxu0 0.0
    %632 = vmatmul.mubr.f32.gmra.mrb[0].mxu0 %v566
    %v633 = vpop.f32.mrb[0].mxu0
    %v634 = vadd.f32 0.0, %v633
    %v635 = vpop.f32.mrb[0].mxu0
    %636 = vdwg.mxu0
    %vm637 = vcmask 195584
    %v638 = vsel %vm637, %v634, 0.0
    %639 = vadd.xlane.f32.xlu0 %v638
    %v640 = vpop.xlane.xlu0 %639
    %v641 = vmax.f32 %v640, 1.0
    %v642 = vrcp.pop %v641
    %v643 = vmul.f32 %v634, %v642
    %v645 = vsel %vm637, %v643, 0
    %647 = vmatprep.subr.mxu0 0.0
    %648 = vmatpush1.msra.mxu0 %v542
    %649 = vmatprep.subr.mxu0 0.0
    %650 = vmatpush1.msra.mxu0 %v543
    %651 = vmatprep.subr.mxu0 0.0
    %652 = vmatpush1.msra.mxu0 %v544
    %653 = vmatprep.subr.mxu0 0.0
    %654 = vmatpush1.msra.mxu0 0.0
    %655 = vmatprep.subr.mxu0 0.0
    %656 = vmatpush1.msra.mxu0 0.0
    %657 = vmatprep.subr.mxu0 0.0
    %658 = vmatpush1.msra.mxu0 0.0
    %659 = vmatprep.subr.mxu0 0.0
    %660 = vmatpush1.msra.mxu0 0.0
    %661 = vmatprep.subr.mxu0 0.0
    %662 = vmatpush1.msra.mxu0 0.0
    %663 = vmatprep.subr.mxu0 0.0
    %664 = vmatpush1.msra.mxu0 0.0
    %665 = vmatprep.subr.mxu0 0.0
    %666 = vmatpush1.msra.mxu0 0.0
    %667 = vmatprep.subr.mxu0 0.0
    %668 = vmatpush1.msra.mxu0 0.0
    %669 = vmatprep.subr.mxu0 0.0
    %670 = vmatpush1.msra.mxu0 0.0
    %671 = vmatprep.subr.mxu0 0.0
    %672 = vmatpush1.msra.mxu0 0.0
    %673 = vmatprep.subr.mxu0 0.0
    %674 = vmatpush1.msra.mxu0 0.0
    %675 = vmatprep.subr.mxu0 0.0
    %676 = vmatpush1.msra.mxu0 0.0
    %677 = vmatprep.subr.mxu0 0.0
    %678 = vmatpush1.msra.mxu0 0.0
    %679 = vmatprep.subr.mxu0 0.0
    %680 = vmatpush1.msra.mxu0 0.0
    %681 = vmatprep.subr.mxu0 0.0
    %682 = vmatpush1.msra.mxu0 0.0
    %683 = vmatprep.subr.mxu0 0.0
    %684 = vmatpush1.msra.mxu0 0.0
    %685 = vmatprep.subr.mxu0 0.0
    %686 = vmatpush1.msra.mxu0 0.0
    %687 = vmatprep.subr.mxu0 0.0
    %688 = vmatpush1.msra.mxu0 0.0
    %689 = vmatprep.subr.mxu0 0.0
    %690 = vmatpush1.msra.mxu0 0.0
    %691 = vmatprep.subr.mxu0 0.0
    %692 = vmatpush1.msra.mxu0 0.0
    %693 = vmatprep.subr.mxu0 0.0
    %694 = vmatpush1.msra.mxu0 0.0
    %695 = vmatprep.subr.mxu0 0.0
    %696 = vmatpush1.msra.mxu0 0.0
    %697 = vmatprep.subr.mxu0 0.0
    %698 = vmatpush1.msra.mxu0 0.0
    %699 = vmatprep.subr.mxu0 0.0
    %700 = vmatpush1.msra.mxu0 0.0
    %701 = vmatprep.subr.mxu0 0.0
    %702 = vmatpush1.msra.mxu0 0.0
    %703 = vmatprep.subr.mxu0 0.0
    %704 = vmatpush1.msra.mxu0 0.0
    %705 = vmatprep.subr.mxu0 0.0
    %706 = vmatpush1.msra.mxu0 0.0
    %707 = vmatprep.subr.mxu0 0.0
    %708 = vmatpush1.msra.mxu0 0.0
    %709 = vmatprep.subr.mxu0 0.0
    %710 = vmatpush1.msra.mxu0 0.0
    %711 = vmatprep.mubr.f32.mxu0 0.0
    %712 = vmatmul.mubr.f32.gmra.mrb[0].mxu0 %v645
    %v713 = vpop.f32.mrb[0].mxu0
    %v714 = vadd.f32 0.0, %v713
    %v715 = vpop.f32.mrb[0].mxu0
    %716 = vdwg.mxu0
    %v717 = vld [vmem:[#allocation8] sm:$0xff]
    %v718 = vld [vmem:[#allocation8 + $0x8] sm:$0xff]
    %v719 = vld [vmem:[#allocation8 + $0x10] sm:$0xff]
    %v720 = vld [vmem:[#allocation8 + $0x18] sm:$0xff]
    %v721 = vld [vmem:[#allocation8 + $0x20] sm:$0xff]
    %v722 = vld [vmem:[#allocation8 + $0x28] sm:$0xff]
    %v723 = vld [vmem:[#allocation8 + $0x30] sm:$0xff]
    %v724 = vld [vmem:[#allocation8 + $0x38] sm:$0xff]
    %v725 = vld [vmem:[#allocation8 + $0x40] sm:$0xff]
    %v726 = vld [vmem:[#allocation8 + $0x48] sm:$0xff]
    %v727 = vld [vmem:[#allocation8 + $0x50] sm:$0xff]
    %v728 = vld [vmem:[#allocation8 + $0x58] sm:$0xff]
    %v729 = vld [vmem:[#allocation8 + $0x60] sm:$0xff]
    %v730 = vld [vmem:[#allocation8 + $0x68] sm:$0xff]
    %v731 = vld [vmem:[#allocation8 + $0x70] sm:$0xff]
    %v732 = vld [vmem:[#allocation8 + $0x78] sm:$0xff]
    %v733 = vld [vmem:[#allocation10] sm:$0xff]
    %v734 = vld [vmem:[#allocation10 + $0x8] sm:$0xff]
    %v735 = vld [vmem:[#allocation10 + $0x10] sm:$0xff]
    %v736 = vld [vmem:[#allocation10 + $0x18] sm:$0xff]
    %v737 = vld [vmem:[#allocation10 + $0x20] sm:$0xff]
    %v738 = vld [vmem:[#allocation10 + $0x28] sm:$0xff]
    %v739 = vld [vmem:[#allocation10 + $0x30] sm:$0xff]
    %v740 = vld [vmem:[#allocation10 + $0x38] sm:$0xff]
    %v741 = vld [vmem:[#allocation10 + $0x40] sm:$0xff]
    %v742 = vld [vmem:[#allocation10 + $0x48] sm:$0xff]
    %v743 = vld [vmem:[#allocation10 + $0x50] sm:$0xff]
    %v744 = vld [vmem:[#allocation10 + $0x58] sm:$0xff]
    %v745 = vld [vmem:[#allocation10 + $0x60] sm:$0xff]
    %v746 = vld [vmem:[#allocation10 + $0x68] sm:$0xff]
    %v747 = vld [vmem:[#allocation10 + $0x70] sm:$0xff]
    %v748 = vld [vmem:[#allocation10 + $0x78] sm:$0xff]
    %749 = vmatprep.subr.mxu0 0.0
    %750 = vmatpush1.msra.mxu0 %v733
    %751 = vmatprep.subr.mxu0 0.0
    %752 = vmatpush1.msra.mxu0 %v734
    %753 = vmatprep.subr.mxu0 0.0
    %754 = vmatpush1.msra.mxu0 %v735
    %755 = vmatprep.subr.mxu0 0.0
    %756 = vmatpush1.msra.mxu0 %v736
    %757 = vmatprep.subr.mxu0 0.0
    %758 = vmatpush1.msra.mxu0 %v737
    %759 = vmatprep.subr.mxu0 0.0
    %760 = vmatpush1.msra.mxu0 %v738
    %761 = vmatprep.subr.mxu0 0.0
    %762 = vmatpush1.msra.mxu0 %v739
    %763 = vmatprep.subr.mxu0 0.0
    %764 = vmatpush1.msra.mxu0 %v740
    %765 = vmatprep.subr.mxu0 0.0
    %766 = vmatpush1.msra.mxu0 %v741
    %767 = vmatprep.subr.mxu0 0.0
    %768 = vmatpush1.msra.mxu0 %v742
    %769 = vmatprep.subr.mxu0 0.0
    %770 = vmatpush1.msra.mxu0 %v743
    %771 = vmatprep.subr.mxu0 0.0
    %772 = vmatpush1.msra.mxu0 %v744
    %773 = vmatprep.subr.mxu0 0.0
    %774 = vmatpush1.msra.mxu0 %v745
    %775 = vmatprep.subr.mxu0 0.0
    %776 = vmatpush1.msra.mxu0 %v746
    %777 = vmatprep.subr.mxu0 0.0
    %778 = vmatpush1.msra.mxu0 %v747
    %779 = vmatprep.subr.mxu0 0.0
    %780 = vmatpush1.msra.mxu0 %v748
    %781 = vmatprep.subr.mxu0 0.0
    %782 = vmatpush1.msra.mxu0 0.0
    %783 = vmatprep.subr.mxu0 0.0
    %784 = vmatpush1.msra.mxu0 0.0
    %785 = vmatprep.subr.mxu0 0.0
    %786 = vmatpush1.msra.mxu0 0.0
    %787 = vmatprep.subr.mxu0 0.0
    %788 = vmatpush1.msra.mxu0 0.0
    %789 = vmatprep.subr.mxu0 0.0
    %790 = vmatpush1.msra.mxu0 0.0
    %791 = vmatprep.subr.mxu0 0.0
    %792 = vmatpush1.msra.mxu0 0.0
    %793 = vmatprep.subr.mxu0 0.0
    %794 = vmatpush1.msra.mxu0 0.0
    %795 = vmatprep.subr.mxu0 0.0
    %796 = vmatpush1.msra.mxu0 0.0
    %797 = vmatprep.subr.mxu0 0.0
    %798 = vmatpush1.msra.mxu0 0.0
    %799 = vmatprep.subr.mxu0 0.0
    %800 = vmatpush1.msra.mxu0 0.0
    %801 = vmatprep.subr.mxu0 0.0
    %802 = vmatpush1.msra.mxu0 0.0
    %803 = vmatprep.subr.mxu0 0.0
    %804 = vmatpush1.msra.mxu0 0.0
    %805 = vmatprep.subr.mxu0 0.0
    %806 = vmatpush1.msra.mxu0 0.0
    %807 = vmatprep.subr.mxu0 0.0
    %808 = vmatpush1.msra.mxu0 0.0
    %809 = vmatprep.subr.mxu0 0.0
    %810 = vmatpush1.msra.mxu0 0.0
    %811 = vmatprep.subr.mxu0 0.0
    %812 = vmatpush1.msra.mxu0 0.0
    %813 = vmatprep.mubr.f32.mxu0 0.0
    %814 = vmatmul.mubr.f32.gmra.mrb[0].mxu0 %v714
    %v815 = vpop.f32.mrb[0].mxu0
    %v816 = vadd.f32 0.0, %v815
    %v817 = vpop.f32.mrb[0].mxu0
    %818 = vdwg.mxu0
    %819 = vmatprep.subr.mxu0 0.0
    %820 = vmatpush1.msra.mxu0 %v717
    %821 = vmatprep.subr.mxu0 0.0
    %822 = vmatpush1.msra.mxu0 %v718
    %823 = vmatprep.subr.mxu0 0.0
    %824 = vmatpush1.msra.mxu0 %v719
    %825 = vmatprep.subr.mxu0 0.0
    %826 = vmatpush1.msra.mxu0 %v720
    %827 = vmatprep.subr.mxu0 0.0
    %828 = vmatpush1.msra.mxu0 %v721
    %829 = vmatprep.subr.mxu0 0.0
    %830 = vmatpush1.msra.mxu0 %v722
    %831 = vmatprep.subr.mxu0 0.0
    %832 = vmatpush1.msra.mxu0 %v723
    %833 = vmatprep.subr.mxu0 0.0
    %834 = vmatpush1.msra.mxu0 %v724
    %835 = vmatprep.subr.mxu0 0.0
    %836 = vmatpush1.msra.mxu0 %v725
    %837 = vmatprep.subr.mxu0 0.0
    %838 = vmatpush1.msra.mxu0 %v726
    %839 = vmatprep.subr.mxu0 0.0
    %840 = vmatpush1.msra.mxu0 %v727
    %841 = vmatprep.subr.mxu0 0.0
    %842 = vmatpush1.msra.mxu0 %v728
    %843 = vmatprep.subr.mxu0 0.0
    %844 = vmatpush1.msra.mxu0 %v729
    %845 = vmatprep.subr.mxu0 0.0
    %846 = vmatpush1.msra.mxu0 %v730
    %847 = vmatprep.subr.mxu0 0.0
    %848 = vmatpush1.msra.mxu0 %v731
    %849 = vmatprep.subr.mxu0 0.0
    %850 = vmatpush1.msra.mxu0 %v732
    %851 = vmatprep.subr.mxu0 0.0
    %852 = vmatpush1.msra.mxu0 0.0
    %853 = vmatprep.subr.mxu0 0.0
    %854 = vmatpush1.msra.mxu0 0.0
    %855 = vmatprep.subr.mxu0 0.0
    %856 = vmatpush1.msra.mxu0 0.0
    %857 = vmatprep.subr.mxu0 0.0
    %858 = vmatpush1.msra.mxu0 0.0
    %859 = vmatprep.subr.mxu0 0.0
    %860 = vmatpush1.msra.mxu0 0.0
    %861 = vmatprep.subr.mxu0 0.0
    %862 = vmatpush1.msra.mxu0 0.0
    %863 = vmatprep.subr.mxu0 0.0
    %864 = vmatpush1.msra.mxu0 0.0
    %865 = vmatprep.subr.mxu0 0.0
    %866 = vmatpush1.msra.mxu0 0.0
    %867 = vmatprep.subr.mxu0 0.0
    %868 = vmatpush1.msra.mxu0 0.0
    %869 = vmatprep.subr.mxu0 0.0
    %870 = vmatpush1.msra.mxu0 0.0
    %871 = vmatprep.subr.mxu0 0.0
    %872 = vmatpush1.msra.mxu0 0.0
    %873 = vmatprep.subr.mxu0 0.0
    %874 = vmatpush1.msra.mxu0 0.0
    %875 = vmatprep.subr.mxu0 0.0
    %876 = vmatpush1.msra.mxu0 0.0
    %877 = vmatprep.subr.mxu0 0.0
    %878 = vmatpush1.msra.mxu0 0.0
    %879 = vmatprep.subr.mxu0 0.0
    %880 = vmatpush1.msra.mxu0 0.0
    %881 = vmatprep.subr.mxu0 0.0
    %882 = vmatpush1.msra.mxu0 0.0
    %883 = vmatprep.mubr.f32.mxu0 0.0
    %884 = vmatmul.mubr.f32.gmra.mrb[0].mxu0 %v542
    %v885 = vpop.f32.mrb[0].mxu0
    %v886 = vadd.f32 %v816, %v885
    %v887 = vpop.f32.mrb[0].mxu0
    %888 = vdwg.mxu0
    %v889 = vld [vmem:[%s10] sm:$0x1]
    %v891 = vlaneseq
    %v892 = vshrl.u32 %v891, 7
    %v893 = vsub.s32 0, %v892
    %v894 = vrot.slane %v889, %v893
    %v896 = vadd.f32 %v886, %v894
    %897 = vst [vmem:[#allocation11] sm:$0xff] %v896
    // Predicated region
    $region66: #{tpu_custom_call.1} parent=1 // pred_check
      _
    $region67: #{tpu_custom_call.1} parent=1 // pred_check_branch
      %899 = sbr.rel (0) target = $region69
    $region68: #{tpu_custom_call.1} parent=1 // pred_region
      %s901 = ssub.s32 128, 128
      %902 = vsyncadd [#allocation4], %s901
      %s904 = sshll.u32 [#allocation11], 4
      %s905 = int_to_ptr.vmem [resolvable:$true] %s904
      %907 = dma.vmem_to_hbm [thread:$0]  %s905, 128, %s11, [#allocation4]
    $region69: #{tpu_custom_call.1} parent=1 // pred_fallthru
      _
    // Predicated region
    $region70: #{tpu_custom_call.1} parent=1 // pred_check
      _
    $region71: #{tpu_custom_call.1} parent=1 // pred_check_branch
      %909 = sbr.rel (0) target = $region73
    $region72: #{tpu_custom_call.1} parent=1 // pred_region
      %910 = dma.done [#allocation4], 128
    $region73: #{tpu_custom_call.1} parent=1 // pred_fallthru
      _
    %911 = vsyncpa [#allocation3], 1
    %912 = vsyncpa [#allocation6], 1
    %913 = vsyncpa [#allocation9], 1
    %914 = vsyncpa [#allocation4], 1

</llo_original>
